<compile_context>
chip_gen: v7x
topology: tpu7x:2x2x1
jax: 0.10.0
libtpu: 0.0.40
codegen_flags: <defaults>
</compile_context>

<pallas_src>
import re

import jax
import jax.numpy as jnp
from jax.experimental import pallas as pl
from jax.experimental.pallas import tpu as pltpu

_LANE = 128
# Lane-width candidates, widest first: wide lane-dense slabs -> long
# contiguous DMA rows and unmasked vector stores.
_WIDTH_CANDIDATES = (8192, 4096, 2048, 1024, 512, 256, 128)


def _tpu_generation():
    """Best-effort TPU generation (5, 6, 7, ...) from device_kind; None if unknown."""
    try:
        kind = jax.devices()[0].device_kind  # e.g. "TPU v5 lite", "TPU v6e"
        m = re.search(r"v(\d+)", str(kind))
        if m:
            return int(m.group(1))
    except Exception:
        pass
    return None


def _gen_tuning(gen):
    """Return (target_block_bytes, vmem_limit_bytes) for this TPU generation."""
    if gen is not None and gen >= 7:
        # v7x: 64 MiB physical VMEM per TC.  8 MiB blocks -> 4 x 8 = 32 MiB
        # double-buffered in+out footprint; 48 MiB scoped limit keeps headroom.
        return 8 * 1024 * 1024, 48 * 1024 * 1024
    if gen == 6:
        # v6e: 128 MiB physical; raise the 32 MiB scoped default so 8 MiB
        # blocks (4 x 8 = 32 MiB footprint) fit comfortably.
        return 8 * 1024 * 1024, 64 * 1024 * 1024
    # v5e / unknown: 4 MiB blocks; 32 MiB raises v5e's 16 MiB scoped default
    # (safe: 128 MiB physical).
    return 4 * 1024 * 1024, 32 * 1024 * 1024


def _pick_width(n):
    for w in _WIDTH_CANDIDATES:
        if n % w == 0:
            return w
    return None


def _make_kernel(native_dtype_compute):
    if native_dtype_compute:
        def kernel(scale_ref, x_ref, o_ref):
            # scale_ref: (1,) f32 in SMEM ; x_ref/o_ref: (block_rows, W) VMEM.
            # Multiply in the input dtype (bf16 VPU on v6e/v7x; f32 everywhere).
            o_ref[...] = x_ref[...] * scale_ref[0].astype(x_ref.dtype)
    else:
        def kernel(scale_ref, x_ref, o_ref):
            # v5e / unknown: no bf16 VPU -> promote to f32, cast back on store.
            o_ref[...] = (x_ref[...].astype(jnp.float32) * scale_ref[0]).astype(o_ref.dtype)
    return kernel


def scale_forward(x, scale, *, donate_input=False):
    """Elementwise multiply of x (any shape) by scalar parameter `scale` (shape (1,)).

    Semantics match OverNet's Scale.forward: output has x's shape and dtype.
    Set donate_input=True only if x is dead after this call (aliases the output
    buffer onto the input, avoiding a second full-size HBM allocation).
    """
    orig_shape = x.shape
    orig_dtype = x.dtype
    scale_f32 = scale.reshape(-1).astype(jnp.float32)

    flat = x.reshape(-1)  # free (no copy) for a contiguous input
    n = flat.shape[0]

    w = _pick_width(n)
    if w is None:
        # Ragged element count: a pad+slice path would add two full-array HBM
        # copies; a plain fused jnp multiply is strictly cheaper here.
        return (x * scale_f32[0]).astype(orig_dtype)

    rows = n // w
    slab = flat.reshape(rows, w)

    gen = _tpu_generation()
    target_block_bytes, vmem_limit_bytes = _gen_tuning(gen)

    itemsize = jnp.dtype(orig_dtype).itemsize
    # Native sublane packing: 8 rows/f32, 16 rows/bf16, 32 rows/int8-fp8.
    sublane = max(8, 32 // max(1, itemsize))
    block_rows = (target_block_bytes // (w * itemsize)) // sublane * sublane
    block_rows = max(sublane, block_rows)
    if block_rows >= rows:
        block_rows = rows  # full-extent block (single grid step), always legal
    grid = (pl.cdiv(rows, block_rows),)

    native_dtype_compute = (jnp.dtype(orig_dtype) == jnp.dtype(jnp.float32)) or (
        gen is not None and gen >= 6
    )
    kernel = _make_kernel(native_dtype_compute)
    aliases = {1: 0} if donate_input else {}

    def _call(dim_sems):
        return pl.pallas_call(
            kernel,
            out_shape=jax.ShapeDtypeStruct((rows, w), orig_dtype),
            grid_spec=pltpu.PrefetchScalarGridSpec(
                num_scalar_prefetch=0,
                grid=grid,
                in_specs=[
                    pl.BlockSpec(memory_space=pltpu.MemorySpace.SMEM),  # scale scalar
                    pl.BlockSpec((block_rows, w), lambda i: (i, 0)),
                ],
                out_specs=pl.BlockSpec((block_rows, w), lambda i: (i, 0)),
            ),
            compiler_params=pltpu.CompilerParams(
                dimension_semantics=dim_sems,
                vmem_limit_bytes=vmem_limit_bytes,
            ),
            input_output_aliases=aliases,
        )(scale_f32, slab)

    if gen is not None and gen >= 7:
        # v7x: shard the row grid across both TensorCores (~2x HBM streaming).
        try:
            out = _call((pltpu.CORE_PARALLEL,))
        except Exception:
            out = _call(("parallel",))
    else:
        out = _call(("parallel",))

    return out.reshape(orig_shape)


if __name__ == "__main__":
    key = jax.random.PRNGKey(0)
    # Deterministic parameter init matching nn.Parameter(torch.FloatTensor([0.001]))
    scale_param = jnp.array([0.001], dtype=jnp.float32)

    # Small NCHW input consistent with how Scale is used inside OverNet.
    x = jax.random.normal(key, (2, 4, 16, 16), dtype=jnp.float32)
    y = scale_forward(x, scale_param)
    jax.block_until_ready(y)
    ref = x * scale_param[0]
    assert y.shape == x.shape and y.dtype == x.dtype
    assert jnp.allclose(y, ref, atol=1e-6, rtol=1e-6)

    # bf16 storage dtype (exercises dtype-aware sublane sizing / compute path).
    xb = jax.random.normal(jax.random.PRNGKey(2), (2, 4, 16, 16), dtype=jnp.bfloat16)
    yb = scale_forward(xb, scale_param)
    jax.block_until_ready(yb)
    refb = (xb.astype(jnp.float32) * scale_param[0]).astype(jnp.bfloat16)
    assert yb.shape == xb.shape and yb.dtype == xb.dtype
    assert jnp.allclose(
        yb.astype(jnp.float32), refb.astype(jnp.float32), atol=1e-2, rtol=1e-2
    )

    # Ragged-size path (element count not a multiple of 128) -> fused jnp fallback.
    x2 = jax.random.normal(jax.random.PRNGKey(1), (3, 5, 7, 11), dtype=jnp.float32)
    y2 = scale_forward(x2, scale_param)
    jax.block_until_ready(y2)
    ref2 = x2 * scale_param[0]
    assert y2.shape == x2.shape and y2.dtype == x2.dtype
    assert jnp.allclose(y2, ref2, atol=1e-6, rtol=1e-6)

    print("KERNEL_OK")
</pallas_src>

<mosaic_0001>
module attributes {stable_mosaic.version = 11 : i64} {
  func.func @kernel(%arg0: i32, %arg1: memref<1xf32, #tpu.memory_space<smem>>, %arg2: memref<1x2048xf32, #tpu.memory_space<vmem>>, %arg3: memref<1x2048xf32, #tpu.memory_space<vmem>>) attributes {dimension_semantics = [#tpu.dimension_semantics<parallel>], iteration_bounds = array<i64: 1>, scalar_prefetch = 0 : i64, scratch_operands = 0 : i64, tpu.core_type = #tpu.core_type<tc>, window_params = [{transform_indices = @transform_0, window_bounds = array<i64: 1>}, {transform_indices = @transform_1, window_bounds = array<i64: 1, 2048>}, {transform_indices = @transform_2, window_bounds = array<i64: 1, 2048>}]} {
    %c0 = arith.constant 0 : index
    %c0_0 = arith.constant 0 : index
    %0 = vector.load %arg2[%c0, %c0_0] : memref<1x2048xf32, #tpu.memory_space<vmem>>, vector<1x2048xf32>
    %c0_1 = arith.constant 0 : index
    %1 = memref.load %arg1[%c0_1] : memref<1xf32, #tpu.memory_space<smem>>
    %2 = vector.broadcast %1 : f32 to vector<1x2048xf32>
    %3 = arith.mulf %0, %2 : vector<1x2048xf32>
    %c0_2 = arith.constant 0 : index
    %c0_3 = arith.constant 0 : index
    %4 = vector.load %arg3[%c0_2, %c0_3] : memref<1x2048xf32, #tpu.memory_space<vmem>>, vector<1x2048xf32>
    tpu.vector_store %arg3[%c0_2, %c0_3], %3 {strides = array<i32>} : memref<1x2048xf32, #tpu.memory_space<vmem>>, vector<1x2048xf32>,
    return
  }
  func.func @transform_0(%arg0: i32) -> i32 {
    %c0_i32 = arith.constant 0 : i32
    %c0_i32_0 = arith.constant 0 : i32
    return %c0_i32 : i32
  }
  func.func @transform_1(%arg0: i32) -> (i32, i32) {
    %c0_i32 = arith.constant 0 : i32
    %c0_i32_0 = arith.constant 0 : i32
    return %arg0, %c0_i32 : i32, i32
  }
  func.func @transform_2(%arg0: i32) -> (i32, i32) {
    %c0_i32 = arith.constant 0 : i32
    %c0_i32_0 = arith.constant 0 : i32
    return %arg0, %c0_i32 : i32, i32
  }
}

</mosaic_0001>

<llo_original>
// kernel: tpu_custom_call.1
$region0: #{tpu_custom_call.1}
  #allocation0 [shape = 'u32[]', space=smem, size = 0x4, offset = 0x4, fixed_abs, tag = 'smem constant byte address 0x4 - core index']
  #allocation1 [shape = 'u32[144,128]{1,0:T(1,128)}', space=vmem, size = 0x12000, scoped, tag = 'internal scratch']
  #allocation2 [shape = 'f32[1]{0:T(128)S(6)}', space=smem, size = 0x200, scoped, tag = 'scoped memory for tpu_custom_call.1']
  %s0 = inlined_call_operand.<no memory space> [shape: f32[1], index: 0, kind: input, shape index: {}]
  %s1 = inlined_call_operand.hbm [shape: f32[1,2048], index: 1, kind: input, shape index: {}]
  %s2 = inlined_call_operand.hbm [shape: f32[1,2048], index: 2, kind: output, shape index: {}]
  %s3 = sld [smem:[#allocation0]]
  $region22: #{tpu_custom_call.1} parent=0
    _
  %s5 = ssub.s32 1, %s3
  %s6 = scalar_select 0, %s5, %s3
  %7 = sst [smem:[#allocation2]] %s0
  $region1: #{tpu_custom_call.1} parent=0
    #allocation3 [shape = 'u8[8192]{0}', space=vmem, size = 0x2000, scoped, tag = 'input window, operand 1, single buffered']
    #allocation4 [shape = 's32[1]{0}', space=sflag, size = 0x4, scoped, tag = 'scoped memory for tpu_custom_call.1']
    #allocation5 [shape = 's32[1]{0}', space=sflag, size = 0x4, scoped, tag = 'scoped memory for tpu_custom_call.1']
    #allocation6 [shape = 'u8[8192]{0}', space=vmem, size = 0x2000, scoped, tag = 'output window, operand 0, single buffered']
    %8 = vsyncpa [#allocation4], 0
    %9 = vsyncpa [#allocation5], 0
    // Predicated region
    $region2: #{tpu_custom_call.1} parent=1 // pred_check
      _
    $region3: #{tpu_custom_call.1} parent=1 // pred_check_branch
      %11 = sbr.rel (0) target = $region5
    $region4: #{tpu_custom_call.1} parent=1 // pred_region
      _
    $region5: #{tpu_custom_call.1} parent=1 // pred_fallthru
      _
    // Predicated region
    $region6: #{tpu_custom_call.1} parent=1 // pred_check
      _
    $region7: #{tpu_custom_call.1} parent=1 // pred_check_branch
      %13 = sbr.rel (0) target = $region9
    $region8: #{tpu_custom_call.1} parent=1 // pred_region
      %s15 = ssub.s32 256, 256
      %16 = vsyncadd [#allocation4], %s15
      %s18 = sshll.u32 [#allocation3], 4
      %s19 = int_to_ptr.vmem [resolvable:$true] %s18
      %21 = dma.hbm_to_vmem [thread:$0]  %s1, 256, %s19, [#allocation4]
    $region9: #{tpu_custom_call.1} parent=1 // pred_fallthru
      _
    // Predicated region
    $region10: #{tpu_custom_call.1} parent=1 // pred_check
      _
    $region11: #{tpu_custom_call.1} parent=1 // pred_check_branch
      %23 = sbr.rel (0) target = $region13
    $region12: #{tpu_custom_call.1} parent=1 // pred_region
      %24 = dma.done [#allocation4], 256
    $region13: #{tpu_custom_call.1} parent=1 // pred_fallthru
      _
    %v25 = vld [vmem:[#allocation3] sm:$0xff]
    %v26 = vld [vmem:[#allocation3 + $0x8] sm:$0xff]
    %s27 = sld [smem:[#allocation2]]
    %v28 = vstv %s27
    %v29 = vmul.f32 %v25, %v28
    %v30 = vmul.f32 %v26, %v28
    %31 = vst [vmem:[#allocation6] sm:$0xff] %v29
    %32 = vst [vmem:[#allocation6 + $0x8] sm:$0xff] %v30
    // Predicated region
    $region14: #{tpu_custom_call.1} parent=1 // pred_check
      _
    $region15: #{tpu_custom_call.1} parent=1 // pred_check_branch
      %34 = sbr.rel (0) target = $region17
    $region16: #{tpu_custom_call.1} parent=1 // pred_region
      %s36 = ssub.s32 256, 256
      %37 = vsyncadd [#allocation5], %s36
      %s39 = sshll.u32 [#allocation6], 4
      %s40 = int_to_ptr.vmem [resolvable:$true] %s39
      %42 = dma.vmem_to_hbm [thread:$0]  %s40, 256, %s2, [#allocation5]
    $region17: #{tpu_custom_call.1} parent=1 // pred_fallthru
      _
    // Predicated region
    $region18: #{tpu_custom_call.1} parent=1 // pred_check
      _
    $region19: #{tpu_custom_call.1} parent=1 // pred_check_branch
      %44 = sbr.rel (0) target = $region21
    $region20: #{tpu_custom_call.1} parent=1 // pred_region
      %45 = dma.done [#allocation5], 256
    $region21: #{tpu_custom_call.1} parent=1 // pred_fallthru
      _
    %46 = vsyncpa [#allocation4], 1
    %47 = vsyncpa [#allocation5], 1

</llo_original>
